<compile_context>
chip_gen: v7x
topology: tpu7x:2x2x1
jax: 0.10.0
libtpu: 0.0.40
codegen_flags: <defaults>
</compile_context>

<pallas_src>
import functools

import jax
import jax.numpy as jnp
from jax.experimental import pallas as pl
from jax.experimental.pallas import tpu as pltpu

LANE = 128          # TPU lane width; every feature dim is zero-padded to this
DROPOUT_P = 0.3
NUM_LAYERS = 3      # three SAGEConv layers


# ---------------------------------------------------------------------------
# Kernel: one grid step = (layer l, row-tile i)
# ---------------------------------------------------------------------------
def graphsage_kernel(a_ref, invdeg_ref, x_ref, ws_ref, bs_ref, mask_ref,
                     w4_ref, b4_ref, o_ref, h_ref, hwl_ref, hwr_ref):
    """Scratch (persistent across grid steps):
      h_ref   (N, 128) bf16 : current layer input H (next layer's input is
                              written back tile-by-tile as we go).
      hwl_ref (N, 128) bf16 : H @ W_l   (refreshed once per layer at i == 0).
      hwr_ref (N, 128) f32  : H @ W_r   (refreshed once per layer at i == 0).
    """
    l = pl.program_id(0)
    i = pl.program_id(1)
    tm = a_ref.shape[0]
    row = i * tm

    # ---- once per layer (first row tile): HW = H @ [W_l | W_r], one matmul.
    @pl.when(i == 0)
    def _refresh_hw():
        @pl.when(l == 0)
        def _seed_h():
            h_ref[...] = x_ref[...]
        hw = jnp.dot(h_ref[...], ws_ref[0],
                     preferred_element_type=jnp.float32)           # (N, 256)
        hwl_ref[...] = hw[:, :LANE].astype(jnp.bfloat16)
        hwr_ref[...] = hw[:, LANE:]

    # ---- per row tile: stream A rows, aggregate on the MXU, f32 epilogue.
    agg = jnp.dot(a_ref[...], hwl_ref[...],
                  preferred_element_type=jnp.float32)              # (TM, 128)
    agg = agg * invdeg_ref[...]                   # exact mean aggregation
    h = agg + hwr_ref[pl.ds(row, tm), :] + bs_ref[0]
    # Dropout is a pure mask; the 1/(1-p) scale is folded into the next weights.
    h = jnp.tanh(h) * mask_ref[0].astype(jnp.float32)
    hb = h.astype(jnp.bfloat16)
    h_ref[pl.ds(row, tm), :] = hb                 # next layer's input tile

    # ---- final Linear fused into the last layer's per-tile epilogue.
    @pl.when(l == NUM_LAYERS - 1)
    def _final_linear():
        o_ref[...] = (jnp.dot(hb, w4_ref[...],
                              preferred_element_type=jnp.float32) + b4_ref[...])


# ---------------------------------------------------------------------------
# Wrapper
# ---------------------------------------------------------------------------
def _vmem_limit_bytes(n, tm):
    blocks = (
        2 * tm * n * 2                                    # A row tile (bf16, 2 bufs)
        + 2 * n * LANE * 2                                # resident X
        + 2 * (LANE * 2 * LANE * 2 + LANE * 4 + tm * LANE * 2)   # ws / bs / mask
        + 2 * (LANE * LANE * 2 + LANE * 4 + tm * 4)               # w4 / b4 / inv_deg
        + 2 * tm * LANE * 4                               # output tile
    )
    scratch = n * LANE * (2 + 2 + 4) + n * 2 * LANE * 4   # h, hwl, hwr + live hw
    total = int(1.5 * (blocks + scratch)) + (8 << 20)
    return max(32 << 20, min(total, 100 << 20))


@functools.partial(jax.jit, static_argnames=("num_classes", "tile_rows"))
def graphsage_forward(packed, a01, inv_deg, x_pad, masks, *,
                      num_classes, tile_rows):
    n = x_pad.shape[0]
    tm = tile_rows
    assert n % tm == 0 and tm % 8 == 0, "tile_rows must divide N and be a multiple of 8"

    flops = (NUM_LAYERS * 2 * n * n * LANE              # aggregation matmuls
             + NUM_LAYERS * 2 * n * LANE * 2 * LANE     # H @ [W_l | W_r]
             + 2 * n * LANE * LANE)                     # final Linear
    bytes_accessed = (NUM_LAYERS * n * n * 2            # A read once per layer
                      + n * LANE * 2                    # X
                      + NUM_LAYERS * n * LANE * 2       # dropout masks
                      + n * LANE * 4                    # output
                      + NUM_LAYERS * (LANE * 2 * LANE * 2 + LANE * 4)
                      + LANE * LANE * 2)
    cost = pl.CostEstimate(flops=flops,
                           transcendentals=NUM_LAYERS * n * LANE,
                           bytes_accessed=bytes_accessed)

    out = pl.pallas_call(
        graphsage_kernel,
        out_shape=jax.ShapeDtypeStruct((n, LANE), jnp.float32),
        grid=(NUM_LAYERS, n // tm),
        in_specs=[
            pl.BlockSpec((tm, n), lambda l, i: (i, 0)),            # A row tile
            pl.BlockSpec((tm, 1), lambda l, i: (i, 0)),            # 1/deg rows
            pl.BlockSpec((n, LANE), lambda l, i: (0, 0)),          # X (resident)
            pl.BlockSpec((1, LANE, 2 * LANE), lambda l, i: (l, 0, 0)),  # [Wl|Wr]
            pl.BlockSpec((1, 1, LANE), lambda l, i: (l, 0, 0)),    # conv bias
            pl.BlockSpec((1, tm, LANE), lambda l, i: (l, i, 0)),   # dropout mask
            pl.BlockSpec((LANE, LANE), lambda l, i: (0, 0)),       # final W
            pl.BlockSpec((1, LANE), lambda l, i: (0, 0)),          # final b
        ],
        out_specs=pl.BlockSpec((tm, LANE), lambda l, i: (i, 0)),
        scratch_shapes=[
            pltpu.VMEM((n, LANE), jnp.bfloat16),   # H (layer input)
            pltpu.VMEM((n, LANE), jnp.bfloat16),   # H @ W_l
            pltpu.VMEM((n, LANE), jnp.float32),    # H @ W_r
        ],
        compiler_params=pltpu.CompilerParams(
            dimension_semantics=("arbitrary", "arbitrary"),
            vmem_limit_bytes=_vmem_limit_bytes(n, tm)),
        cost_estimate=cost,
    )(a01, inv_deg, x_pad, packed["ws"], packed["bs"], masks,
      packed["w4"], packed["b4"])
    return out[:, :num_classes]


# ---------------------------------------------------------------------------
# Glue: graph preprocessing, padding, parameter init / packing (one-time work)
# ---------------------------------------------------------------------------
def build_graph(edge_index, num_nodes):
    """Exact small-integer bf16 adjacency counts (edge j->i sets A[i,j]) plus
    exact f32 per-row 1/deg applied to the f32 accumulator in-kernel."""
    src, dst = edge_index[0], edge_index[1]
    counts = jnp.zeros((num_nodes, num_nodes), jnp.float32).at[dst, src].add(1.0)
    deg = counts.sum(axis=1, keepdims=True)
    inv_deg = 1.0 / jnp.maximum(deg, 1.0)
    return counts.astype(jnp.bfloat16), inv_deg


def pad_features(x, lane=LANE):
    n, f = x.shape
    return jnp.zeros((n, lane), jnp.float32).at[:, :f].set(x).astype(jnp.bfloat16)


def init_params(key, in_feats, num_classes):
    dims = [(in_feats, 64), (64, 128), (128, 64)]
    params = {}
    for i, (fi, fo) in enumerate(dims, start=1):
        key, k1, k2, k3 = jax.random.split(key, 4)
        scale = 1.0 / jnp.sqrt(jnp.float32(fi))
        params[f"conv{i}_wl"] = jax.random.normal(k1, (fi, fo), jnp.float32) * scale
        params[f"conv{i}_wr"] = jax.random.normal(k2, (fi, fo), jnp.float32) * scale
        params[f"conv{i}_b"] = jax.random.normal(k3, (fo,), jnp.float32) * 0.01
    key, k1, k2 = jax.random.split(key, 3)
    scale = 1.0 / jnp.sqrt(jnp.float32(64))
    params["lin_w"] = jax.random.normal(k1, (64, num_classes), jnp.float32) * scale
    params["lin_b"] = jax.random.normal(k2, (num_classes,), jnp.float32) * 0.01
    return params


def pack_params(params, num_classes, p=DROPOUT_P, lane=LANE):
    """Pad + fuse SAGEConv/Linear weights into kernel-ready bf16 blocks.

    Each conv becomes one (128, 256) block [W_l | W_r].  The inverted-dropout
    scale 1/(1-p) of the dropout *preceding* a layer is folded into that
    layer's weights (conv2, conv3, final Linear), so the kernel's dropout is a
    pure 0/1 mask multiply.
    """
    assert num_classes <= lane
    keep = 1.0 - p

    def hstack_pad(wl, wr, scale):
        w = jnp.zeros((lane, 2 * lane), jnp.float32)
        w = w.at[:wl.shape[0], :wl.shape[1]].set(wl * scale)
        w = w.at[:wr.shape[0], lane:lane + wr.shape[1]].set(wr * scale)
        return w

    def bias_pad(b):
        return jnp.zeros((1, lane), jnp.float32).at[0, :b.shape[0]].set(b)

    ws = jnp.stack([
        hstack_pad(params["conv1_wl"], params["conv1_wr"], 1.0),
        hstack_pad(params["conv2_wl"], params["conv2_wr"], 1.0 / keep),
        hstack_pad(params["conv3_wl"], params["conv3_wr"], 1.0 / keep),
    ]).astype(jnp.bfloat16)
    bs = jnp.stack([bias_pad(params["conv1_b"]),
                    bias_pad(params["conv2_b"]),
                    bias_pad(params["conv3_b"])])
    w4 = jnp.zeros((lane, lane), jnp.float32)
    w4 = w4.at[:params["lin_w"].shape[0], :num_classes].set(params["lin_w"] / keep)
    return {"ws": ws, "bs": bs, "w4": w4.astype(jnp.bfloat16),
            "b4": bias_pad(params["lin_b"])}


def make_dropout_masks(key, num_nodes, p=DROPOUT_P, lane=LANE):
    """Training-mode keep masks (0/1 bf16); scale is folded into the weights."""
    keep = jax.random.bernoulli(key, 1.0 - p, (NUM_LAYERS, num_nodes, lane))
    return keep.astype(jnp.bfloat16)


def graphsage_reference(packed, a01, inv_deg, x_pad, masks):
    """Pure-JAX mirror of the kernel math (same bf16 casts) for verification."""
    h = x_pad
    for l in range(NUM_LAYERS):
        hw = jnp.dot(h, packed["ws"][l], preferred_element_type=jnp.float32)
        hwl = hw[:, :LANE].astype(jnp.bfloat16)
        hwr = hw[:, LANE:]
        agg = jnp.dot(a01, hwl, preferred_element_type=jnp.float32) * inv_deg
        h = (jnp.tanh(agg + hwr + packed["bs"][l])
             * masks[l].astype(jnp.float32)).astype(jnp.bfloat16)
    return jnp.dot(h, packed["w4"], preferred_element_type=jnp.float32) + packed["b4"]


# ---------------------------------------------------------------------------
if __name__ == "__main__":
    key = jax.random.PRNGKey(0)
    k_x, k_e, k_p, k_d = jax.random.split(key, 4)

    num_nodes = 64
    in_feats = 32
    num_classes = 8
    num_edges = 256
    tile_rows = 32          # 2 row tiles -> exercises the (layer, row-tile) grid

    x = jax.random.normal(k_x, (num_nodes, in_feats), jnp.float32)
    edge_index = jax.random.randint(k_e, (2, num_edges), 0, num_nodes,
                                    dtype=jnp.int32)
    params = init_params(k_p, in_feats, num_classes)

    # One-time / per-graph preprocessing, hoisted out of the hot forward path.
    a01, inv_deg = build_graph(edge_index, num_nodes)
    x_pad = pad_features(x)
    packed = pack_params(params, num_classes)
    masks = make_dropout_masks(k_d, num_nodes)     # training-mode dropout masks

    out = graphsage_forward(packed, a01, inv_deg, x_pad, masks,
                            num_classes=num_classes, tile_rows=tile_rows)
    out = jax.block_until_ready(out)

    ref = graphsage_reference(packed, a01, inv_deg, x_pad, masks)[:, :num_classes]
    assert out.shape == (num_nodes, num_classes)
    assert bool(jnp.all(jnp.isfinite(out)))
    assert bool(jnp.allclose(out, ref, rtol=5e-2, atol=5e-2))
    print("KERNEL_OK")
</pallas_src>

<mosaic_0001>
module attributes {stable_mosaic.version = 11 : i64} {
  func.func @graphsage_kernel(%arg0: i32, %arg1: i32, %arg2: memref<32x64xbf16, #tpu.memory_space<vmem>>, %arg3: memref<32x1xf32, #tpu.memory_space<vmem>>, %arg4: memref<64x128xbf16, #tpu.memory_space<vmem>>, %arg5: memref<1x128x256xbf16, #tpu.memory_space<vmem>>, %arg6: memref<1x1x128xf32, #tpu.memory_space<vmem>>, %arg7: memref<1x32x128xbf16, #tpu.memory_space<vmem>>, %arg8: memref<128x128xbf16, #tpu.memory_space<vmem>>, %arg9: memref<1x128xf32, #tpu.memory_space<vmem>>, %arg10: memref<32x128xf32, #tpu.memory_space<vmem>>, %arg11: memref<64x128xbf16, #tpu.memory_space<vmem>>, %arg12: memref<64x128xbf16, #tpu.memory_space<vmem>>, %arg13: memref<64x128xf32, #tpu.memory_space<vmem>>) attributes {dimension_semantics = [#tpu.dimension_semantics<arbitrary>, #tpu.dimension_semantics<arbitrary>], iteration_bounds = array<i64: 3, 2>, scalar_prefetch = 0 : i64, scratch_operands = 3 : i64, tpu.core_type = #tpu.core_type<tc>, window_params = [{transform_indices = @transform_0, window_bounds = array<i64: 32, 64>}, {transform_indices = @transform_1, window_bounds = array<i64: 32, 1>}, {pipeline_mode = #tpu.pipeline_mode<synchronous>, transform_indices = @transform_2, window_bounds = array<i64: 64, 128>}, {transform_indices = @transform_3, window_bounds = array<i64: 1, 128, 256>}, {transform_indices = @transform_4, window_bounds = array<i64: 1, 1, 128>}, {transform_indices = @transform_5, window_bounds = array<i64: 1, 32, 128>}, {pipeline_mode = #tpu.pipeline_mode<synchronous>, transform_indices = @transform_6, window_bounds = array<i64: 128, 128>}, {pipeline_mode = #tpu.pipeline_mode<synchronous>, transform_indices = @transform_7, window_bounds = array<i64: 1, 128>}, {transform_indices = @transform_8, window_bounds = array<i64: 32, 128>}]} {
    %c32_i32 = arith.constant 32 : i32
    %0 = arith.muli %arg1, %c32_i32 : i32
    %c0_i32 = arith.constant 0 : i32
    %1 = arith.cmpi eq, %arg1, %c0_i32 : i32
    %2 = arith.extui %1 : i1 to i32
    %c0_i32_0 = arith.constant 0 : i32
    %3 = arith.cmpi ne, %2, %c0_i32_0 : i32
    scf.if %3 {
      %c0_i32_15 = arith.constant 0 : i32
      %28 = arith.cmpi eq, %arg0, %c0_i32_15 : i32
      %29 = arith.extui %28 : i1 to i32
      %c0_i32_16 = arith.constant 0 : i32
      %30 = arith.cmpi ne, %29, %c0_i32_16 : i32
      scf.if %30 {
        %c0_27 = arith.constant 0 : index
        %c0_28 = arith.constant 0 : index
        %40 = vector.load %arg4[%c0_27, %c0_28] : memref<64x128xbf16, #tpu.memory_space<vmem>>, vector<64x128xbf16>
        %c0_29 = arith.constant 0 : index
        %c0_30 = arith.constant 0 : index
        %41 = vector.load %arg11[%c0_29, %c0_30] : memref<64x128xbf16, #tpu.memory_space<vmem>>, vector<64x128xbf16>
        tpu.vector_store %arg11[%c0_29, %c0_30], %40 {strides = array<i32>} : memref<64x128xbf16, #tpu.memory_space<vmem>>, vector<64x128xbf16>,
      } else {
      }
      %c0_17 = arith.constant 0 : index
      %c0_18 = arith.constant 0 : index
      %31 = vector.load %arg11[%c0_17, %c0_18] : memref<64x128xbf16, #tpu.memory_space<vmem>>, vector<64x128xbf16>
      %c0_19 = arith.constant 0 : index
      %c0_20 = arith.constant 0 : index
      %c0_21 = arith.constant 0 : index
      %32 = vector.load %arg5[%c0_19, %c0_20, %c0_21] : memref<1x128x256xbf16, #tpu.memory_space<vmem>>, vector<1x128x256xbf16>
      %33 = vector.shape_cast %32 : vector<1x128x256xbf16> to vector<128x256xbf16>
      %cst_22 = arith.constant dense<0.000000e+00> : vector<64x256xf32>
      %34 = tpu.matmul %31, %33, %cst_22 {dimension_numbers = #tpu.dot_dimension_numbers<[1], [0], [0], [1], [0, 0, 1, 1], [], []>} : vector<64x128xbf16>, vector<128x256xbf16>, vector<64x256xf32> -> vector<64x256xf32>
      %35 = vector.extract_strided_slice %34 {offsets = [0, 0], sizes = [64, 128], strides = [1, 1]} : vector<64x256xf32> to vector<64x128xf32>
      %36 = arith.truncf %35 : vector<64x128xf32> to vector<64x128xbf16>
      %c0_23 = arith.constant 0 : index
      %c0_24 = arith.constant 0 : index
      %37 = vector.load %arg12[%c0_23, %c0_24] : memref<64x128xbf16, #tpu.memory_space<vmem>>, vector<64x128xbf16>
      tpu.vector_store %arg12[%c0_23, %c0_24], %36 {strides = array<i32>} : memref<64x128xbf16, #tpu.memory_space<vmem>>, vector<64x128xbf16>,
      %38 = vector.extract_strided_slice %34 {offsets = [0, 128], sizes = [64, 128], strides = [1, 1]} : vector<64x256xf32> to vector<64x128xf32>
      %c0_25 = arith.constant 0 : index
      %c0_26 = arith.constant 0 : index
      %39 = vector.load %arg13[%c0_25, %c0_26] : memref<64x128xf32, #tpu.memory_space<vmem>>, vector<64x128xf32>
      tpu.vector_store %arg13[%c0_25, %c0_26], %38 {strides = array<i32>} : memref<64x128xf32, #tpu.memory_space<vmem>>, vector<64x128xf32>,
    } else {
    }
    %c0 = arith.constant 0 : index
    %c0_1 = arith.constant 0 : index
    %4 = vector.load %arg2[%c0, %c0_1] : memref<32x64xbf16, #tpu.memory_space<vmem>>, vector<32x64xbf16>
    %c0_2 = arith.constant 0 : index
    %c0_3 = arith.constant 0 : index
    %5 = vector.load %arg12[%c0_2, %c0_3] : memref<64x128xbf16, #tpu.memory_space<vmem>>, vector<64x128xbf16>
    %cst = arith.constant dense<0.000000e+00> : vector<32x128xf32>
    %6 = tpu.matmul %4, %5, %cst {dimension_numbers = #tpu.dot_dimension_numbers<[1], [0], [0], [1], [0, 0, 1, 1], [], []>} : vector<32x64xbf16>, vector<64x128xbf16>, vector<32x128xf32> -> vector<32x128xf32>
    %c0_4 = arith.constant 0 : index
    %c0_5 = arith.constant 0 : index
    %7 = vector.load %arg3[%c0_4, %c0_5] : memref<32x1xf32, #tpu.memory_space<vmem>>, vector<32x1xf32>
    %8 = vector.broadcast %7 : vector<32x1xf32> to vector<32x128xf32>
    %9 = arith.mulf %6, %8 : vector<32x128xf32>
    %10 = arith.index_cast %0 : i32 to index
    %c0_6 = arith.constant 0 : index
    %11 = vector.load %arg13[%10, %c0_6] : memref<64x128xf32, #tpu.memory_space<vmem>>, vector<32x128xf32>
    %12 = arith.addf %9, %11 : vector<32x128xf32>
    %c0_7 = arith.constant 0 : index
    %c0_8 = arith.constant 0 : index
    %c0_9 = arith.constant 0 : index
    %13 = vector.load %arg6[%c0_7, %c0_8, %c0_9] : memref<1x1x128xf32, #tpu.memory_space<vmem>>, vector<1x1x128xf32>
    %14 = vector.shape_cast %13 : vector<1x1x128xf32> to vector<1x128xf32>
    %15 = vector.broadcast %14 : vector<1x128xf32> to vector<32x128xf32>
    %16 = arith.addf %12, %15 : vector<32x128xf32>
    %17 = math.tanh %16 : vector<32x128xf32>
    %c0_10 = arith.constant 0 : index
    %c0_11 = arith.constant 0 : index
    %c0_12 = arith.constant 0 : index
    %18 = vector.load %arg7[%c0_10, %c0_11, %c0_12] : memref<1x32x128xbf16, #tpu.memory_space<vmem>>, vector<1x32x128xbf16>
    %19 = vector.shape_cast %18 : vector<1x32x128xbf16> to vector<32x128xbf16>
    %20 = arith.extf %19 : vector<32x128xbf16> to vector<32x128xf32>
    %21 = arith.mulf %17, %20 : vector<32x128xf32>
    %22 = arith.truncf %21 : vector<32x128xf32> to vector<32x128xbf16>
    %23 = arith.index_cast %0 : i32 to index
    %c0_13 = arith.constant 0 : index
    %24 = vector.load %arg11[%23, %c0_13] : memref<64x128xbf16, #tpu.memory_space<vmem>>, vector<32x128xbf16>
    tpu.vector_store %arg11[%23, %c0_13], %22 {strides = array<i32>} : memref<64x128xbf16, #tpu.memory_space<vmem>>, vector<32x128xbf16>,
    %c2_i32 = arith.constant 2 : i32
    %25 = arith.cmpi eq, %arg0, %c2_i32 : i32
    %26 = arith.extui %25 : i1 to i32
    %c0_i32_14 = arith.constant 0 : i32
    %27 = arith.cmpi ne, %26, %c0_i32_14 : i32
    scf.if %27 {
      %c0_15 = arith.constant 0 : index
      %c0_16 = arith.constant 0 : index
      %28 = vector.load %arg8[%c0_15, %c0_16] : memref<128x128xbf16, #tpu.memory_space<vmem>>, vector<128x128xbf16>
      %cst_17 = arith.constant dense<0.000000e+00> : vector<32x128xf32>
      %29 = tpu.matmul %22, %28, %cst_17 {dimension_numbers = #tpu.dot_dimension_numbers<[1], [0], [0], [1], [0, 0, 1, 1], [], []>} : vector<32x128xbf16>, vector<128x128xbf16>, vector<32x128xf32> -> vector<32x128xf32>
      %c0_18 = arith.constant 0 : index
      %c0_19 = arith.constant 0 : index
      %30 = vector.load %arg9[%c0_18, %c0_19] : memref<1x128xf32, #tpu.memory_space<vmem>>, vector<1x128xf32>
      %31 = vector.broadcast %30 : vector<1x128xf32> to vector<32x128xf32>
      %32 = arith.addf %29, %31 : vector<32x128xf32>
      %c0_20 = arith.constant 0 : index
      %c0_21 = arith.constant 0 : index
      %33 = vector.load %arg10[%c0_20, %c0_21] : memref<32x128xf32, #tpu.memory_space<vmem>>, vector<32x128xf32>
      tpu.vector_store %arg10[%c0_20, %c0_21], %32 {strides = array<i32>} : memref<32x128xf32, #tpu.memory_space<vmem>>, vector<32x128xf32>,
    } else {
    }
    return
  }
  func.func @transform_0(%arg0: i32, %arg1: i32) -> (i32, i32) {
    %c0_i32 = arith.constant 0 : i32
    %c0_i32_0 = arith.constant 0 : i32
    return %arg1, %c0_i32 : i32, i32
  }
  func.func @transform_1(%arg0: i32, %arg1: i32) -> (i32, i32) {
    %c0_i32 = arith.constant 0 : i32
    %c0_i32_0 = arith.constant 0 : i32
    return %arg1, %c0_i32 : i32, i32
  }
  func.func @transform_2(%arg0: i32, %arg1: i32) -> (i32, i32) {
    %c0_i32 = arith.constant 0 : i32
    %c0_i32_0 = arith.constant 0 : i32
    %c0_i32_1 = arith.constant 0 : i32
    return %c0_i32, %c0_i32_0 : i32, i32
  }
  func.func @transform_3(%arg0: i32, %arg1: i32) -> (i32, i32, i32) {
    %c0_i32 = arith.constant 0 : i32
    %c0_i32_0 = arith.constant 0 : i32
    %c0_i32_1 = arith.constant 0 : i32
    return %arg0, %c0_i32, %c0_i32_0 : i32, i32, i32
  }
  func.func @transform_4(%arg0: i32, %arg1: i32) -> (i32, i32, i32) {
    %c0_i32 = arith.constant 0 : i32
    %c0_i32_0 = arith.constant 0 : i32
    %c0_i32_1 = arith.constant 0 : i32
    return %arg0, %c0_i32, %c0_i32_0 : i32, i32, i32
  }
  func.func @transform_5(%arg0: i32, %arg1: i32) -> (i32, i32, i32) {
    %c0_i32 = arith.constant 0 : i32
    %c0_i32_0 = arith.constant 0 : i32
    return %arg0, %arg1, %c0_i32 : i32, i32, i32
  }
  func.func @transform_6(%arg0: i32, %arg1: i32) -> (i32, i32) {
    %c0_i32 = arith.constant 0 : i32
    %c0_i32_0 = arith.constant 0 : i32
    %c0_i32_1 = arith.constant 0 : i32
    return %c0_i32, %c0_i32_0 : i32, i32
  }
  func.func @transform_7(%arg0: i32, %arg1: i32) -> (i32, i32) {
    %c0_i32 = arith.constant 0 : i32
    %c0_i32_0 = arith.constant 0 : i32
    %c0_i32_1 = arith.constant 0 : i32
    return %c0_i32, %c0_i32_0 : i32, i32
  }
  func.func @transform_8(%arg0: i32, %arg1: i32) -> (i32, i32) {
    %c0_i32 = arith.constant 0 : i32
    %c0_i32_0 = arith.constant 0 : i32
    return %arg1, %c0_i32 : i32, i32
  }
}

</mosaic_0001>

<llo_original>
// kernel: graphsage_forward.1
$region0: #{graphsage_forward.1}
  #allocation0 [shape = 'u32[]', space=smem, size = 0x4, offset = 0x4, fixed_abs, tag = 'smem constant byte address 0x4 - core index']
  #allocation1 [shape = 'u32[144,128]{1,0:T(1,128)}', space=vmem, size = 0x12000, scoped, tag = 'internal scratch']
  #allocation2 [shape = 'bf16[64,128]{1,0:T(16,128)(2,1)}', space=vmem, size = 0x4000, scoped, tag = 'scratch operand']
  #allocation3 [shape = 'bf16[64,128]{1,0:T(16,128)(2,1)}', space=vmem, size = 0x4000, scoped, tag = 'scratch operand']
  #allocation4 [shape = 'f32[64,128]{1,0:T(8,128)}', space=vmem, size = 0x8000, scoped, tag = 'scratch operand']
  %s0 = inlined_call_operand.hbm [shape: bf16[64,64], index: 0, kind: input, shape index: {}]
  %s1 = inlined_call_operand.vmem [shape: f32[64,1], index: 1, kind: input, shape index: {}]
  %s2 = inlined_call_operand.hbm [shape: bf16[64,128], index: 2, kind: input, shape index: {}]
  %s3 = inlined_call_operand.hbm [shape: bf16[3,128,256], index: 3, kind: input, shape index: {}]
  %s4 = inlined_call_operand.vmem [shape: f32[3,1,128], index: 4, kind: input, shape index: {}]
  %s5 = inlined_call_operand.hbm [shape: bf16[3,64,128], index: 5, kind: input, shape index: {}]
  %s6 = inlined_call_operand.vmem [shape: bf16[128,128], index: 6, kind: input, shape index: {}]
  %s7 = inlined_call_operand.vmem [shape: f32[1,128], index: 7, kind: input, shape index: {}]
  %s8 = inlined_call_operand.vmem [shape: f32[64,128], index: 8, kind: output, shape index: {}]
  %s9 = sld [smem:[#allocation0]]
  $region93: #{graphsage_forward.1} parent=0
    _
  %s11 = ssub.s32 1, %s9
  %s12 = scalar_select 0, %s11, %s9
  $region1: #{graphsage_forward.1} parent=0
    #allocation5 [shape = 'u8[16384]{0}', space=vmem, size = 0x4000, scoped, tag = 'input window, operand 0']
    #allocation6 [shape = 's32[2]{0}', space=sflag, size = 0x8, scoped, tag = 'scoped memory for graphsage_forward.1']
    #allocation7 [shape = 'u8[16384]{0}', space=vmem, size = 0x4000, scoped, tag = 'input window, operand 2, single buffered']
    #allocation8 [shape = 's32[1]{0}', space=sflag, size = 0x4, scoped, tag = 'scoped memory for graphsage_forward.1']
    #allocation9 [shape = 'u8[131072]{0}', space=vmem, size = 0x20000, scoped, tag = 'input window, operand 3']
    #allocation10 [shape = 'u8[16384]{0}', space=vmem, size = 0x4000, scoped, tag = 'input window, operand 5']
    %13 = vsyncpa [#allocation6], 0
    %s14 = scalar_lea.sflag [#allocation6], 1
    %15 = vsyncpa %s14, 0
    %16 = vsyncpa [#allocation8], 0
    loop: start=0, step=1, limit=8
    $region2: #{graphsage_forward.1} parent=1 // loop_pre_header
      _
    $region3: #{graphsage_forward.1} parent=1 // loop_header
      %s18 = sphi 0, %s22
      %p19 = scmp.ge.s32.totalorder %s18, 8
      %s25 = sphi 0, %s37
      %s26 = sphi 0, %s33
      %s27 = sphi 0, %s25
      %s28 = sphi 0, %s26
      %s29 = sphi 0, %s27
      %s30 = sphi 0, %s28
      %s40 = sphi 0, %s42
      %s43 = sphi 0, %s40
      %s44 = sphi 0, %s43
      %s60 = sphi 0, %s44
      %s66 = sphi 0, %s68
      %s69 = sphi 0, %s66
      %s70 = sphi 0, %s69
      %s86 = sphi 0, %s70
      %s90 = sphi 0, %s90
      %s92 = sphi 0, %s90
      %s93 = sphi 0, %s92
      %s107 = sphi 0, %s93
      %s113 = sphi 0, %s115
      %s116 = sphi 0, %s113
      %s117 = sphi 0, %s116
      %s133 = sphi 0, %s117
      %s139 = sphi 0, %s141
      %s142 = sphi 0, %s139
      %s143 = sphi 0, %s142
      %s159 = sphi 0, %s143
      %s167 = sphi 0, %s169
      %s170 = sphi 0, %s167
      %s171 = sphi 0, %s170
      %s187 = sphi 0, %s171
      %s191 = sphi 0, %s191
      %s193 = sphi 0, %s191
      %s194 = sphi 0, %s193
      %s208 = sphi 0, %s194
      %s212 = sphi 0, %s212
      %s214 = sphi 0, %s212
      %s215 = sphi 0, %s214
      %s229 = sphi 0, %s215
      %s235 = sphi 0, %s237
      %s238 = sphi 0, %s235
      %s239 = sphi 0, %s238
      %s255 = sphi 0, %s239
    $region4: #{graphsage_forward.1} parent=1 // loop_header_branch
      %21 = sbr.rel (%p19) target = $region8
    $region5: #{graphsage_forward.1} parent=1 // loop_body
      %s23 = ssub.s32 %s18, 1
      %s24 = ssub.s32 %s18, 2
      %s31 = sadd.s32 1, %s26
      %p32 = scmp.ge.s32.totalorder %s31, 2
      %s33 = scalar_select %p32, 0, %s31
      %s34 = sadd.s32 1, %s25
      %s35 = scalar_select %p32, %s34, %s25
      %p36 = scmp.ge.s32.totalorder %s35, 3
      %s37 = scalar_select %p36, 0, %s35
      %s38 = ssub.s32 %s26, %s33
      %p39 = scmp.eq.s32.totalorder %s38, 0
      %s41 = sadd.s32 %s40, 1
      %s42 = scalar_select %p39, %s40, %s41
      %p45 = pneg %p39
      %p46 = scmp.eq.s32.totalorder %s18, 5
      %p47 = por %p45, %p46
      %p48 = scmp.ne.s32.totalorder %s40, %s43
      %p49 = scmp.eq.s32.totalorder %s18, 0
      %p50 = por %p48, %p49
      %p51 = scmp.ne.s32.totalorder %s40, %s43
      %p52 = scmp.eq.s32.totalorder %s23, 5
      %p53 = por %p51, %p52
      %p54 = scmp.ne.s32.totalorder %s43, %s44
      %p55 = scmp.eq.s32.totalorder %s23, 0
      %p56 = por %p54, %p55
      %p57 = scmp.ne.s32.totalorder %s43, %s44
      %p58 = scmp.eq.s32.totalorder %s24, 5
      %p59 = por %p57, %p58
      %p61 = scmp.ne.s32.totalorder %s44, %s60
      %p62 = scmp.eq.s32.totalorder %s24, 0
      %p63 = por %p61, %p62
      %s64 = ssub.s32 %s26, %s33
      %p65 = scmp.eq.s32.totalorder %s64, 0
      %s67 = sadd.s32 %s66, 1
      %s68 = scalar_select %p65, %s66, %s67
      %p71 = pneg %p65
      %p72 = scmp.eq.s32.totalorder %s18, 5
      %p73 = por %p71, %p72
      %p74 = scmp.ne.s32.totalorder %s66, %s69
      %p75 = scmp.eq.s32.totalorder %s18, 0
      %p76 = por %p74, %p75
      %p77 = scmp.ne.s32.totalorder %s66, %s69
      %p78 = scmp.eq.s32.totalorder %s23, 5
      %p79 = por %p77, %p78
      %p80 = scmp.ne.s32.totalorder %s69, %s70
      %p81 = scmp.eq.s32.totalorder %s23, 0
      %p82 = por %p80, %p81
      %p83 = scmp.ne.s32.totalorder %s69, %s70
      %p84 = scmp.eq.s32.totalorder %s24, 5
      %p85 = por %p83, %p84
      %p87 = scmp.ne.s32.totalorder %s70, %s86
      %p88 = scmp.eq.s32.totalorder %s24, 0
      %p89 = por %p87, %p88
      %s91 = sadd.s32 %s90, 1
      %p94 = scmp.eq.s32.totalorder %s18, 5
      %p95 = scmp.ne.s32.totalorder %s90, %s92
      %p96 = scmp.eq.s32.totalorder %s18, 0
      %p97 = por %p95, %p96
      %p98 = scmp.ne.s32.totalorder %s90, %s92
      %p99 = scmp.eq.s32.totalorder %s23, 5
      %p100 = por %p98, %p99
      %p101 = scmp.ne.s32.totalorder %s92, %s93
      %p102 = scmp.eq.s32.totalorder %s23, 0
      %p103 = por %p101, %p102
      %p104 = scmp.ne.s32.totalorder %s92, %s93
      %p105 = scmp.eq.s32.totalorder %s24, 5
      %p106 = por %p104, %p105
      %p108 = scmp.ne.s32.totalorder %s93, %s107
      %p109 = scmp.eq.s32.totalorder %s24, 0
      %p110 = por %p108, %p109
      %s111 = ssub.s32 %s25, %s37
      %p112 = scmp.eq.s32.totalorder %s111, 0
      %s114 = sadd.s32 %s113, 1
      %s115 = scalar_select %p112, %s113, %s114
      %p118 = pneg %p112
      %p119 = scmp.eq.s32.totalorder %s18, 5
      %p120 = por %p118, %p119
      %p121 = scmp.ne.s32.totalorder %s113, %s116
      %p122 = scmp.eq.s32.totalorder %s18, 0
      %p123 = por %p121, %p122
      %p124 = scmp.ne.s32.totalorder %s113, %s116
      %p125 = scmp.eq.s32.totalorder %s23, 5
      %p126 = por %p124, %p125
      %p127 = scmp.ne.s32.totalorder %s116, %s117
      %p128 = scmp.eq.s32.totalorder %s23, 0
      %p129 = por %p127, %p128
      %p130 = scmp.ne.s32.totalorder %s116, %s117
      %p131 = scmp.eq.s32.totalorder %s24, 5
      %p132 = por %p130, %p131
      %p134 = scmp.ne.s32.totalorder %s117, %s133
      %p135 = scmp.eq.s32.totalorder %s24, 0
      %p136 = por %p134, %p135
      %s137 = ssub.s32 %s25, %s37
      %p138 = scmp.eq.s32.totalorder %s137, 0
      %s140 = sadd.s32 %s139, 1
      %s141 = scalar_select %p138, %s139, %s140
      %p144 = pneg %p138
      %p145 = scmp.eq.s32.totalorder %s18, 5
      %p146 = por %p144, %p145
      %p147 = scmp.ne.s32.totalorder %s139, %s142
      %p148 = scmp.eq.s32.totalorder %s18, 0
      %p149 = por %p147, %p148
      %p150 = scmp.ne.s32.totalorder %s139, %s142
      %p151 = scmp.eq.s32.totalorder %s23, 5
      %p152 = por %p150, %p151
      %p153 = scmp.ne.s32.totalorder %s142, %s143
      %p154 = scmp.eq.s32.totalorder %s23, 0
      %p155 = por %p153, %p154
      %p156 = scmp.ne.s32.totalorder %s142, %s143
      %p157 = scmp.eq.s32.totalorder %s24, 5
      %p158 = por %p156, %p157
      %p160 = scmp.ne.s32.totalorder %s143, %s159
      %p161 = scmp.eq.s32.totalorder %s24, 0
      %p162 = por %p160, %p161
      %s163 = ssub.s32 %s25, %s37
      %s164 = ssub.s32 %s26, %s33
      %s165 = sor.u32 %s163, %s164
      %p166 = scmp.eq.s32.totalorder %s165, 0
      %s168 = sadd.s32 %s167, 1
      %s169 = scalar_select %p166, %s167, %s168
      %p172 = pneg %p166
      %p173 = scmp.eq.s32.totalorder %s18, 5
      %p174 = por %p172, %p173
      %p175 = scmp.ne.s32.totalorder %s167, %s170
      %p176 = scmp.eq.s32.totalorder %s18, 0
      %p177 = por %p175, %p176
      %p178 = scmp.ne.s32.totalorder %s167, %s170
      %p179 = scmp.eq.s32.totalorder %s23, 5
      %p180 = por %p178, %p179
      %p181 = scmp.ne.s32.totalorder %s170, %s171
      %p182 = scmp.eq.s32.totalorder %s23, 0
      %p183 = por %p181, %p182
      %p184 = scmp.ne.s32.totalorder %s170, %s171
      %p185 = scmp.eq.s32.totalorder %s24, 5
      %p186 = por %p184, %p185
      %p188 = scmp.ne.s32.totalorder %s171, %s187
      %p189 = scmp.eq.s32.totalorder %s24, 0
      %p190 = por %p188, %p189
      %s192 = sadd.s32 %s191, 1
      %p195 = scmp.eq.s32.totalorder %s18, 5
      %p196 = scmp.ne.s32.totalorder %s191, %s193
      %p197 = scmp.eq.s32.totalorder %s18, 0
      %p198 = por %p196, %p197
      %p199 = scmp.ne.s32.totalorder %s191, %s193
      %p200 = scmp.eq.s32.totalorder %s23, 5
      %p201 = por %p199, %p200
      %p202 = scmp.ne.s32.totalorder %s193, %s194
      %p203 = scmp.eq.s32.totalorder %s23, 0
      %p204 = por %p202, %p203
      %p205 = scmp.ne.s32.totalorder %s193, %s194
      %p206 = scmp.eq.s32.totalorder %s24, 5
      %p207 = por %p205, %p206
      %p209 = scmp.ne.s32.totalorder %s194, %s208
      %p210 = scmp.eq.s32.totalorder %s24, 0
      %p211 = por %p209, %p210
      %s213 = sadd.s32 %s212, 1
      %p216 = scmp.eq.s32.totalorder %s18, 5
      %p217 = scmp.ne.s32.totalorder %s212, %s214
      %p218 = scmp.eq.s32.totalorder %s18, 0
      %p219 = por %p217, %p218
      %p220 = scmp.ne.s32.totalorder %s212, %s214
      %p221 = scmp.eq.s32.totalorder %s23, 5
      %p222 = por %p220, %p221
      %p223 = scmp.ne.s32.totalorder %s214, %s215
      %p224 = scmp.eq.s32.totalorder %s23, 0
      %p225 = por %p223, %p224
      %p226 = scmp.ne.s32.totalorder %s214, %s215
      %p227 = scmp.eq.s32.totalorder %s24, 5
      %p228 = por %p226, %p227
      %p230 = scmp.ne.s32.totalorder %s215, %s229
      %p231 = scmp.eq.s32.totalorder %s24, 0
      %p232 = por %p230, %p231
      %s233 = ssub.s32 %s26, %s33
      %p234 = scmp.eq.s32.totalorder %s233, 0
      %s236 = sadd.s32 %s235, 1
      %s237 = scalar_select %p234, %s235, %s236
      %p240 = pneg %p234
      %p241 = scmp.eq.s32.totalorder %s18, 5
      %p242 = por %p240, %p241
      %p243 = scmp.ne.s32.totalorder %s235, %s238
      %p244 = scmp.eq.s32.totalorder %s18, 0
      %p245 = por %p243, %p244
      %p246 = scmp.ne.s32.totalorder %s235, %s238
      %p247 = scmp.eq.s32.totalorder %s23, 5
      %p248 = por %p246, %p247
      %p249 = scmp.ne.s32.totalorder %s238, %s239
      %p250 = scmp.eq.s32.totalorder %s23, 0
      %p251 = por %p249, %p250
      %p252 = scmp.ne.s32.totalorder %s238, %s239
      %p253 = scmp.eq.s32.totalorder %s24, 5
      %p254 = por %p252, %p253
      %p256 = scmp.ne.s32.totalorder %s239, %s255
      %p257 = scmp.eq.s32.totalorder %s24, 0
      %p258 = por %p256, %p257
      %p259 = scmp.le.s32.totalorder 1, %s18
      %p260 = scmp.lt.s32.totalorder %s18, 7
      %p261 = pnand %p259, %p260
      %p262 = pneg %p261
      // Predicated region
      $region9: #{graphsage_forward.1} parent=5 // pred_check
        _
      $region10: #{graphsage_forward.1} parent=5 // pred_check_branch
        %264 = sbr.rel (%p261) target = $region12
      $region11: #{graphsage_forward.1} parent=5 // pred_region
        %s265 = ssub.s32 %s18, 1
        // Predicated region
        $region13: #{graphsage_forward.1} parent=11 // pred_check
          %p266 = pneg %p103
        $region14: #{graphsage_forward.1} parent=11 // pred_check_branch
          %268 = sbr.rel (%p266) target = $region16
        $region15: #{graphsage_forward.1} parent=11 // pred_region
          %s270 = ssub.s32 512, 512
          %271 = vsyncadd [#allocation8], %s270
          %s272 = sshll.u32 [#allocation7], 4
          %s273 = int_to_ptr.vmem [resolvable:$true] %s272
          %278 = dma.hbm_to_vmem [thread:$0]  %s2, 512, %s273, [#allocation8], 64, 64, 4
        $region16: #{graphsage_forward.1} parent=11 // pred_fallthru
          _
        // Predicated region
        $region17: #{graphsage_forward.1} parent=11 // pred_check
          %p279 = pneg %p204
        $region18: #{graphsage_forward.1} parent=11 // pred_check_branch
          %281 = sbr.rel (%p279) target = $region20
        $region19: #{graphsage_forward.1} parent=11 // pred_region
          _
        $region20: #{graphsage_forward.1} parent=11 // pred_fallthru
          _
        // Predicated region
        $region21: #{graphsage_forward.1} parent=11 // pred_check
          %p282 = pneg %p225
        $region22: #{graphsage_forward.1} parent=11 // pred_check_branch
          %284 = sbr.rel (%p282) target = $region24
        $region23: #{graphsage_forward.1} parent=11 // pred_region
          _
        $region24: #{graphsage_forward.1} parent=11 // pred_fallthru
          _
      $region12: #{graphsage_forward.1} parent=5 // pred_fallthru
        _
      %p285 = scmp.lt.s32.totalorder %s18, 6
      // Predicated region
      $region25: #{graphsage_forward.1} parent=5 // pred_check
        %p286 = pneg %p285
      $region26: #{graphsage_forward.1} parent=5 // pred_check_branch
        %288 = sbr.rel (%p286) target = $region28
      $region27: #{graphsage_forward.1} parent=5 // pred_region
        // Predicated region
        $region29: #{graphsage_forward.1} parent=27 // pred_check
          %p289 = pneg %p50
        $region30: #{graphsage_forward.1} parent=27 // pred_check_branch
          %291 = sbr.rel (%p289) target = $region32
        $region31: #{graphsage_forward.1} parent=27 // pred_region
          %s292 = sand.u32 %s18, 1
          %s293 = scalar_lea.sflag [#allocation6], %s292
          %s294 = sand.u32 %s40, 1
          %s295 = smul.addr %s294, 16
          %s296 = scalar_lea.vmem [#allocation5], %s295
          %s297 = smul.u32 4, %s26
          %s299 = ssub.s32 256, 256
          %300 = vsyncadd %s293, %s299
          %s301 = smul.addr %s297, 64
          %s302 = scalar_lea.hbm %s0, %s301
          %s303 = sshll.u32 %s296, 4
          %s304 = int_to_ptr.vmem [resolvable:$true] %s303
          %309 = dma.hbm_to_vmem [thread:$0]  %s302, 256, %s304, %s293, 64, 64, 4
        $region32: #{graphsage_forward.1} parent=27 // pred_fallthru
          _
        // Predicated region
        $region33: #{graphsage_forward.1} parent=27 // pred_check
          %p310 = pneg %p76
        $region34: #{graphsage_forward.1} parent=27 // pred_check_branch
          %312 = sbr.rel (%p310) target = $region36
        $region35: #{graphsage_forward.1} parent=27 // pred_region
          %s313 = smul.u32 4, %s26
          %p314 = scmp.lt.s32.totalorder %s313, 7
          %s315 = scalar_select %p314, %s313, 7
          %s316 = smul.addr %s315, 8
          %s317 = scalar_lea.vmem %s1, %s316
          %s318 = smul.u32 4, %s26
        $region36: #{graphsage_forward.1} parent=27 // pred_fallthru
          _
        // Predicated region
        $region37: #{graphsage_forward.1} parent=27 // pred_check
          %p319 = pneg %p123
        $region38: #{graphsage_forward.1} parent=27 // pred_check_branch
          %321 = sbr.rel (%p319) target = $region40
        $region39: #{graphsage_forward.1} parent=27 // pred_region
          %s322 = sand.u32 %s18, 1
          %s323 = scalar_lea.sflag [#allocation6], %s322
          %s324 = sand.u32 %s113, 1
          %s325 = smul.addr %s324, 128
          %s326 = scalar_lea.vmem [#allocation9], %s325
          %s328 = ssub.s32 2048, 2048
          %329 = vsyncadd %s323, %s328
          %s330 = smul.addr %s25, 32
          %s331 = smul.addr %s330, 64
          %s332 = scalar_lea.hbm %s3, %s331
          %s333 = sshll.u32 %s326, 4
          %s334 = int_to_ptr.vmem [resolvable:$true] %s333
          %339 = dma.hbm_to_vmem [thread:$0]  %s332, 2048, %s334, %s323, 128, 128, 8
        $region40: #{graphsage_forward.1} parent=27 // pred_fallthru
          _
        // Predicated region
        $region41: #{graphsage_forward.1} parent=27 // pred_check
          %p340 = pneg %p149
        $region42: #{graphsage_forward.1} parent=27 // pred_check_branch
          %342 = sbr.rel (%p340) target = $region44
        $region43: #{graphsage_forward.1} parent=27 // pred_region
          %p343 = scmp.lt.s32.totalorder %s25, 2
          %s344 = scalar_select %p343, %s25, 2
          %s345 = scalar_lea.vmem %s4, %s344
        $region44: #{graphsage_forward.1} parent=27 // pred_fallthru
          _
        // Predicated region
        $region45: #{graphsage_forward.1} parent=27 // pred_check
          %p346 = pneg %p177
        $region46: #{graphsage_forward.1} parent=27 // pred_check_branch
          %348 = sbr.rel (%p346) target = $region48
        $region47: #{graphsage_forward.1} parent=27 // pred_region
          %s349 = sand.u32 %s18, 1
          %s350 = scalar_lea.sflag [#allocation6], %s349
          %s351 = sand.u32 %s167, 1
          %s352 = smul.addr %s351, 16
          %s353 = scalar_lea.vmem [#allocation10], %s352
          %s354 = smul.u32 4, %s26
          %s356 = ssub.s32 256, 256
          %357 = vsyncadd %s350, %s356
          %s358 = smul.addr %s25, 8
          %s359 = sadd.s32 %s354, %s358
          %s360 = smul.addr %s359, 64
          %s361 = scalar_lea.hbm %s5, %s360
          %s362 = sshll.u32 %s353, 4
          %s363 = int_to_ptr.vmem [resolvable:$true] %s362
          %368 = dma.hbm_to_vmem [thread:$0]  %s361, 256, %s363, %s350, 64, 64, 4
        $region48: #{graphsage_forward.1} parent=27 // pred_fallthru
          _
      $region28: #{graphsage_forward.1} parent=5 // pred_fallthru
        _
      %p369 = scmp.le.s32.totalorder 1, %s18
      %p370 = scmp.lt.s32.totalorder %s18, 7
      %p371 = pnand %p369, %p370
      %p372 = pneg %p371
      // Predicated region
      $region49: #{graphsage_forward.1} parent=5 // pred_check
        _
      $region50: #{graphsage_forward.1} parent=5 // pred_check_branch
        %374 = sbr.rel (%p371) target = $region52
      $region51: #{graphsage_forward.1} parent=5 // pred_region
        %s375 = ssub.s32 %s18, 1
        %s376 = sand.u32 %s23, 1
        %s377 = scalar_lea.sflag [#allocation6], %s376
        %s378 = sand.u32 %s43, 1
        %s379 = smul.addr %s378, 16
        %s380 = scalar_lea.vmem [#allocation5], %s379
        // Predicated region
        $region53: #{graphsage_forward.1} parent=51 // pred_check
          %p381 = pneg %p56
        $region54: #{graphsage_forward.1} parent=51 // pred_check_branch
          %383 = sbr.rel (%p381) target = $region56
        $region55: #{graphsage_forward.1} parent=51 // pred_region
          %384 = dma.done %s377, 256
        $region56: #{graphsage_forward.1} parent=51 // pred_fallthru
          _
        // Predicated region
        $region57: #{graphsage_forward.1} parent=51 // pred_check
          %p385 = pneg %p103
        $region58: #{graphsage_forward.1} parent=51 // pred_check_branch
          %387 = sbr.rel (%p385) target = $region60
        $region59: #{graphsage_forward.1} parent=51 // pred_region
          %388 = dma.done [#allocation8], 512
        $region60: #{graphsage_forward.1} parent=51 // pred_fallthru
          _
        %s389 = sand.u32 %s23, 1
        %s390 = scalar_lea.sflag [#allocation6], %s389
        %s391 = sand.u32 %s116, 1
        %s392 = smul.addr %s391, 128
        %s393 = scalar_lea.vmem [#allocation9], %s392
        // Predicated region
        $region61: #{graphsage_forward.1} parent=51 // pred_check
          %p394 = pneg %p129
        $region62: #{graphsage_forward.1} parent=51 // pred_check_branch
          %396 = sbr.rel (%p394) target = $region64
        $region63: #{graphsage_forward.1} parent=51 // pred_region
          %397 = dma.done %s390, 2048
        $region64: #{graphsage_forward.1} parent=51 // pred_fallthru
          _
        %s398 = sand.u32 %s23, 1
        %s399 = scalar_lea.sflag [#allocation6], %s398
        %s400 = sand.u32 %s170, 1
        %s401 = smul.addr %s400, 16
        %s402 = scalar_lea.vmem [#allocation10], %s401
        // Predicated region
        $region65: #{graphsage_forward.1} parent=51 // pred_check
          %p403 = pneg %p183
        $region66: #{graphsage_forward.1} parent=51 // pred_check_branch
          %405 = sbr.rel (%p403) target = $region68
        $region67: #{graphsage_forward.1} parent=51 // pred_region
          %406 = dma.done %s399, 256
        $region68: #{graphsage_forward.1} parent=51 // pred_fallthru
          _
        %s407 = sand.u32 %s23, 1
        %s408 = scalar_lea.sflag [#allocation6], %s407
        %s409 = sand.u32 %s43, 1
        %s410 = smul.addr %s409, 16
        %s411 = scalar_lea.vmem [#allocation5], %s410
        %p412 = pneg %p56
        %p413 = pneg %p53
        %s414 = smul.u32 4, %s28
        %p415 = scmp.lt.s32.totalorder %s414, 7
        %s416 = scalar_select %p415, %s414, 7
        %s417 = smul.addr %s416, 8
        %s418 = scalar_lea.vmem %s1, %s417
        %p419 = pneg %p82
        %p420 = pneg %p79
        %p421 = pneg %p103
        %p422 = pneg %p100
        %s423 = sand.u32 %s23, 1
        %s424 = scalar_lea.sflag [#allocation6], %s423
        %s425 = sand.u32 %s116, 1
        %s426 = smul.addr %s425, 128
        %s427 = scalar_lea.vmem [#allocation9], %s426
        %p428 = pneg %p129
        %p429 = pneg %p126
        %p430 = scmp.lt.s32.totalorder %s27, 2
        %s431 = scalar_select %p430, %s27, 2
        %s432 = scalar_lea.vmem %s4, %s431
        %p433 = pneg %p155
        %p434 = pneg %p152
        %s435 = sand.u32 %s23, 1
        %s436 = scalar_lea.sflag [#allocation6], %s435
        %s437 = sand.u32 %s170, 1
        %s438 = smul.addr %s437, 16
        %s439 = scalar_lea.vmem [#allocation10], %s438
        %p440 = pneg %p183
        %p441 = pneg %p180
        %p442 = pneg %p204
        %p443 = pneg %p201
        %p444 = pneg %p225
        %p445 = pneg %p222
        %p446 = pneg %p251
        %p447 = pneg %p248
        %s448 = smul.u32 4, %s28
        %p449 = scmp.lt.s32.totalorder %s448, 7
        %s450 = scalar_select %p449, %s448, 7
        %s451 = smul.addr %s450, 8
        %s452 = scalar_lea.vmem %s8, %s451
        %s453 = smul.u32 4, %s28
        %s454 = smul.u32 4, %s28
        %p455 = scmp.lt.s32.totalorder %s454, 7
        %s456 = scalar_select %p455, %s454, 7
        %s457 = smul.addr %s456, 8
        %s458 = scalar_lea.vmem %s1, %s457
        %s459 = smul.u32 4, %s28
        %p460 = scmp.lt.s32.totalorder %s27, 2
        %s461 = scalar_select %p460, %s27, 2
        %s462 = scalar_lea.vmem %s4, %s461
        %s463 = smul.u32 4, %s28
        %s464 = smul.u32 4, %s28
        %p465 = scmp.lt.s32.totalorder %s464, 7
        %s466 = scalar_select %p465, %s464, 7
        %s467 = smul.addr %s466, 8
        %s468 = scalar_lea.vmem %s8, %s467
        %s469 = smul.u32 4, %s28
        %s471 = smul.u32 %s28, 32
        %p472 = scmp.eq.s32.totalorder %s28, 0
        // Predicated region
        $region69: #{graphsage_forward.1} parent=51 // pred_check
          %p473 = pneg %p472
        $region70: #{graphsage_forward.1} parent=51 // pred_check_branch
          %475 = sbr.rel (%p473) target = $region72
        $region71: #{graphsage_forward.1} parent=51 // pred_region
          %p476 = scmp.eq.s32.totalorder %s27, 0
          // Predicated region
          $region73: #{graphsage_forward.1} parent=71 // pred_check
            %p477 = pneg %p476
          $region74: #{graphsage_forward.1} parent=71 // pred_check_branch
            %479 = sbr.rel (%p477) target = $region76
          $region75: #{graphsage_forward.1} parent=71 // pred_region
            %v480 = vld [vmem:[#allocation7] sm:$0xf]
            %v481 = vld [vmem:[#allocation7 + $0x4] sm:$0xf]
            %v482 = vld [vmem:[#allocation7 + $0x8] sm:$0xf]
            %v483 = vld [vmem:[#allocation7 + $0xc] sm:$0xf]
            %v484 = vld [vmem:[#allocation7 + $0x10] sm:$0xf]
            %v485 = vld [vmem:[#allocation7 + $0x14] sm:$0xf]
            %v486 = vld [vmem:[#allocation7 + $0x18] sm:$0xf]
            %v487 = vld [vmem:[#allocation7 + $0x1c] sm:$0xf]
            %v496 = vunpack.c.l.b16 %v480
            %v497 = vunpack.c.l.b16 %v481
            %v498 = vunpack.c.l.b16 %v482
            %v499 = vunpack.c.l.b16 %v483
            %v500 = vunpack.c.l.b16 %v484
            %v501 = vunpack.c.l.b16 %v485
            %v502 = vunpack.c.l.b16 %v486
            %v503 = vunpack.c.l.b16 %v487
            %v504 = vpack.c.b16 %v497, %v496
            %v505 = vpack.c.b16 %v499, %v498
            %v506 = vpack.c.b16 %v501, %v500
            %v507 = vpack.c.b16 %v503, %v502
            %512 = vst [vmem:[#allocation2] sm:$0xff] %v504
            %513 = vst [vmem:[#allocation2 + $0x8] sm:$0xff] %v505
            %514 = vst [vmem:[#allocation2 + $0x10] sm:$0xff] %v506
            %515 = vst [vmem:[#allocation2 + $0x18] sm:$0xff] %v507
          $region76: #{graphsage_forward.1} parent=71 // pred_fallthru
            _
          %v516 = vld [vmem:[#allocation2] sm:$0xff]
          %v517 = vld [vmem:[#allocation2 + $0x8] sm:$0xff]
          %v518 = vld [vmem:[#allocation2 + $0x10] sm:$0xff]
          %v519 = vld [vmem:[#allocation2 + $0x18] sm:$0xff]
          %v520 = vld [vmem:[%s393] sm:$0xff]
          %v521 = vld [vmem:[%s393 + $0x8] sm:$0xff]
          %v522 = vld [vmem:[%s393 + $0x10] sm:$0xff]
          %v523 = vld [vmem:[%s393 + $0x18] sm:$0xff]
          %v524 = vld [vmem:[%s393 + $0x20] sm:$0xff]
          %v525 = vld [vmem:[%s393 + $0x28] sm:$0xff]
          %v526 = vld [vmem:[%s393 + $0x30] sm:$0xff]
          %v527 = vld [vmem:[%s393 + $0x38] sm:$0xff]
          %v528 = vld [vmem:[%s393 + $0x40] sm:$0xff]
          %v529 = vld [vmem:[%s393 + $0x48] sm:$0xff]
          %v530 = vld [vmem:[%s393 + $0x50] sm:$0xff]
          %v531 = vld [vmem:[%s393 + $0x58] sm:$0xff]
          %v532 = vld [vmem:[%s393 + $0x60] sm:$0xff]
          %v533 = vld [vmem:[%s393 + $0x68] sm:$0xff]
          %v534 = vld [vmem:[%s393 + $0x70] sm:$0xff]
          %v535 = vld [vmem:[%s393 + $0x78] sm:$0xff]
          %v552 = vunpack.c.l.b16 %v520
          %v553 = vunpack.c.h.b16 %v520
          %v554 = vunpack.c.l.b16 %v521
          %v555 = vunpack.c.h.b16 %v521
          %v556 = vunpack.c.l.b16 %v522
          %v557 = vunpack.c.h.b16 %v522
          %v558 = vunpack.c.l.b16 %v523
          %v559 = vunpack.c.h.b16 %v523
          %v560 = vunpack.c.l.b16 %v524
          %v561 = vunpack.c.h.b16 %v524
          %v562 = vunpack.c.l.b16 %v525
          %v563 = vunpack.c.h.b16 %v525
          %v564 = vunpack.c.l.b16 %v526
          %v565 = vunpack.c.h.b16 %v526
          %v566 = vunpack.c.l.b16 %v527
          %v567 = vunpack.c.h.b16 %v527
          %v568 = vunpack.c.l.b16 %v528
          %v569 = vunpack.c.h.b16 %v528
          %v570 = vunpack.c.l.b16 %v529
          %v571 = vunpack.c.h.b16 %v529
          %v572 = vunpack.c.l.b16 %v530
          %v573 = vunpack.c.h.b16 %v530
          %v574 = vunpack.c.l.b16 %v531
          %v575 = vunpack.c.h.b16 %v531
          %v576 = vunpack.c.l.b16 %v532
          %v577 = vunpack.c.h.b16 %v532
          %v578 = vunpack.c.l.b16 %v533
          %v579 = vunpack.c.h.b16 %v533
          %v580 = vunpack.c.l.b16 %v534
          %v581 = vunpack.c.h.b16 %v534
          %v582 = vunpack.c.l.b16 %v535
          %v583 = vunpack.c.h.b16 %v535
          %v584 = vpack.c.b16 %v554, %v552
          %v585 = vpack.c.b16 %v555, %v553
          %v586 = vpack.c.b16 %v558, %v556
          %v587 = vpack.c.b16 %v559, %v557
          %v588 = vpack.c.b16 %v562, %v560
          %v589 = vpack.c.b16 %v563, %v561
          %v590 = vpack.c.b16 %v566, %v564
          %v591 = vpack.c.b16 %v567, %v565
          %v592 = vpack.c.b16 %v570, %v568
          %v593 = vpack.c.b16 %v571, %v569
          %v594 = vpack.c.b16 %v574, %v572
          %v595 = vpack.c.b16 %v575, %v573
          %v596 = vpack.c.b16 %v578, %v576
          %v597 = vpack.c.b16 %v579, %v577
          %v598 = vpack.c.b16 %v582, %v580
          %v599 = vpack.c.b16 %v583, %v581
          %616 = vmatprep.subr.bf16.mxu0 %v585
          %617 = vmatpush1.bf16.msra.mxu0 %v584
          %618 = vmatprep.subr.bf16.mxu0 %v587
          %619 = vmatpush1.bf16.msra.mxu0 %v586
          %620 = vmatprep.subr.bf16.mxu0 %v589
          %621 = vmatpush1.bf16.msra.mxu0 %v588
          %622 = vmatprep.subr.bf16.mxu0 %v591
          %623 = vmatpush1.bf16.msra.mxu0 %v590
          %624 = vmatprep.subr.bf16.mxu0 %v593
          %625 = vmatpush1.bf16.msra.mxu0 %v592
          %626 = vmatprep.subr.bf16.mxu0 %v595
          %627 = vmatpush1.bf16.msra.mxu0 %v594
          %628 = vmatprep.subr.bf16.mxu0 %v597
          %629 = vmatpush1.bf16.msra.mxu0 %v596
          %630 = vmatprep.subr.bf16.mxu0 %v599
          %631 = vmatpush1.bf16.msra.mxu0 %v598
          %632 = vmatprep.subr.bf16.mxu0 0
          %633 = vmatpush1.bf16.msra.mxu0 0
          %634 = vmatprep.subr.bf16.mxu0 0
          %635 = vmatpush1.bf16.msra.mxu0 0
          %636 = vmatprep.subr.bf16.mxu0 0
          %637 = vmatpush1.bf16.msra.mxu0 0
          %638 = vmatprep.subr.bf16.mxu0 0
          %639 = vmatpush1.bf16.msra.mxu0 0
          %640 = vmatprep.subr.bf16.mxu0 0
          %641 = vmatpush1.bf16.msra.mxu0 0
          %642 = vmatprep.subr.bf16.mxu0 0
          %643 = vmatpush1.bf16.msra.mxu0 0
          %644 = vmatprep.subr.bf16.mxu0 0
          %645 = vmatpush1.bf16.msra.mxu0 0
          %646 = vmatprep.subr.bf16.mxu0 0
          %647 = vmatpush1.bf16.msra.mxu0 0
          %648 = vmatprep.mubr.bf16.mxu0 0
          %649 = vmatmul.mubr.bf16.gmra.mrb[0].mxu0 %v516
          %v650 = vpop.f32.mrb[0].mxu0
          %v651 = vadd.f32 0.0, %v650
          %v652 = vpop.f32.mrb[0].mxu0
          %v653 = vadd.f32 0.0, %v652
          %v654 = vpop.f32.mrb[0].mxu0
          %v655 = vadd.f32 0.0, %v654
          %v656 = vpop.f32.mrb[0].mxu0
          %v657 = vadd.f32 0.0, %v656
          %658 = vmatprep.mubr.bf16.mxu0 0
          %659 = vmatmul.mubr.bf16.gmra.mrb[0].mxu0 %v517
          %v660 = vpop.f32.mrb[0].mxu0
          %v661 = vadd.f32 0.0, %v660
          %v662 = vpop.f32.mrb[0].mxu0
          %v663 = vadd.f32 0.0, %v662
          %v664 = vpop.f32.mrb[0].mxu0
          %v665 = vadd.f32 0.0, %v664
          %v666 = vpop.f32.mrb[0].mxu0
          %v667 = vadd.f32 0.0, %v666
          %668 = vmatprep.mubr.bf16.mxu0 0
          %669 = vmatmul.mubr.bf16.gmra.mrb[0].mxu0 %v518
          %v670 = vpop.f32.mrb[0].mxu0
          %v671 = vadd.f32 0.0, %v670
          %v672 = vpop.f32.mrb[0].mxu0
          %v673 = vadd.f32 0.0, %v672
          %v674 = vpop.f32.mrb[0].mxu0
          %v675 = vadd.f32 0.0, %v674
          %v676 = vpop.f32.mrb[0].mxu0
          %v677 = vadd.f32 0.0, %v676
          %678 = vmatprep.mubr.bf16.mxu0 0
          %679 = vmatmul.mubr.bf16.gmra.mrb[0].mxu0 %v519
          %v680 = vpop.f32.mrb[0].mxu0
          %v681 = vadd.f32 0.0, %v680
          %v682 = vpop.f32.mrb[0].mxu0
          %v683 = vadd.f32 0.0, %v682
          %v684 = vpop.f32.mrb[0].mxu0
          %v685 = vadd.f32 0.0, %v684
          %v686 = vpop.f32.mrb[0].mxu0
          %v687 = vadd.f32 0.0, %v686
          %688 = vdwg.mxu0
          %v689 = vpack.c.bf16 %v655, %v651
          %v690 = vpack.c.bf16 %v665, %v661
          %v691 = vpack.c.bf16 %v675, %v671
          %v692 = vpack.c.bf16 %v685, %v681
          %693 = vst [vmem:[#allocation3] sm:$0xff] %v689
          %694 = vst [vmem:[#allocation3 + $0x8] sm:$0xff] %v690
          %695 = vst [vmem:[#allocation3 + $0x10] sm:$0xff] %v691
          %696 = vst [vmem:[#allocation3 + $0x18] sm:$0xff] %v692
          %697 = vst [vmem:[#allocation4] sm:$0xff] %v653
          %698 = vst [vmem:[#allocation4 + $0x8] sm:$0xff] %v657
          %699 = vst [vmem:[#allocation4 + $0x10] sm:$0xff] %v663
          %700 = vst [vmem:[#allocation4 + $0x18] sm:$0xff] %v667
          %701 = vst [vmem:[#allocation4 + $0x20] sm:$0xff] %v673
          %702 = vst [vmem:[#allocation4 + $0x28] sm:$0xff] %v677
          %703 = vst [vmem:[#allocation4 + $0x30] sm:$0xff] %v683
          %704 = vst [vmem:[#allocation4 + $0x38] sm:$0xff] %v687
        $region72: #{graphsage_forward.1} parent=51 // pred_fallthru
          _
        %v705 = vld [vmem:[%s380] sm:$0xf]
        %v706 = vld [vmem:[%s380 + $0x4] sm:$0xf]
        %v707 = vld [vmem:[%s380 + $0x8] sm:$0xf]
        %v708 = vld [vmem:[%s380 + $0xc] sm:$0xf]
        %v709 = vld [vmem:[#allocation3] sm:$0xff]
        %v710 = vld [vmem:[#allocation3 + $0x8] sm:$0xff]
        %v711 = vld [vmem:[#allocation3 + $0x10] sm:$0xff]
        %v712 = vld [vmem:[#allocation3 + $0x18] sm:$0xff]
        %v717 = vunpack.c.l.b16 %v705
        %v718 = vunpack.c.l.b16 %v706
        %v719 = vunpack.c.l.b16 %v707
        %v720 = vunpack.c.l.b16 %v708
        %v721 = vpack.c.b16 %v718, %v717
        %v722 = vpack.c.b16 %v720, %v719
        %vm723 = vcmask 523264
        %v725 = vsel %vm723, %v721, 0
        %v728 = vsel %vm723, %v722, 0
        %730 = vmatprep.subr.bf16.mxu0 0
        %731 = vmatpush1.bf16.msra.mxu0 %v709
        %732 = vmatprep.subr.bf16.mxu0 0
        %733 = vmatpush1.bf16.msra.mxu0 %v710
        %734 = vmatprep.subr.bf16.mxu0 0
        %735 = vmatpush1.bf16.msra.mxu0 %v711
        %736 = vmatprep.subr.bf16.mxu0 0
        %737 = vmatpush1.bf16.msra.mxu0 %v712
        %738 = vmatprep.subr.bf16.mxu0 0
        %739 = vmatpush1.bf16.msra.mxu0 0
        %740 = vmatprep.subr.bf16.mxu0 0
        %741 = vmatpush1.bf16.msra.mxu0 0
        %742 = vmatprep.subr.bf16.mxu0 0
        %743 = vmatpush1.bf16.msra.mxu0 0
        %744 = vmatprep.subr.bf16.mxu0 0
        %745 = vmatpush1.bf16.msra.mxu0 0
        %746 = vmatprep.subr.bf16.mxu0 0
        %747 = vmatpush1.bf16.msra.mxu0 0
        %748 = vmatprep.subr.bf16.mxu0 0
        %749 = vmatpush1.bf16.msra.mxu0 0
        %750 = vmatprep.subr.bf16.mxu0 0
        %751 = vmatpush1.bf16.msra.mxu0 0
        %752 = vmatprep.subr.bf16.mxu0 0
        %753 = vmatpush1.bf16.msra.mxu0 0
        %754 = vmatprep.subr.bf16.mxu0 0
        %755 = vmatpush1.bf16.msra.mxu0 0
        %756 = vmatprep.subr.bf16.mxu0 0
        %757 = vmatpush1.bf16.msra.mxu0 0
        %758 = vmatprep.subr.bf16.mxu0 0
        %759 = vmatpush1.bf16.msra.mxu0 0
        %760 = vmatprep.subr.bf16.mxu0 0
        %761 = vmatpush1.bf16.msra.mxu0 0
        %762 = vmatprep.mubr.bf16.mxu0 0
        %763 = vmatmul.mubr.bf16.gmra.mrb[0].mxu0 %v725
        %v764 = vpop.f32.mrb[0].mxu0
        %v765 = vadd.f32 0.0, %v764
        %v766 = vpop.f32.mrb[0].mxu0
        %v767 = vpop.f32.mrb[0].mxu0
        %v768 = vadd.f32 0.0, %v767
        %v769 = vpop.f32.mrb[0].mxu0
        %770 = vmatprep.mubr.bf16.mxu0 0
        %771 = vmatmul.mubr.bf16.gmra.mrb[0].mxu0 %v728
        %v772 = vpop.f32.mrb[0].mxu0
        %v773 = vadd.f32 0.0, %v772
        %v774 = vpop.f32.mrb[0].mxu0
        %v775 = vpop.f32.mrb[0].mxu0
        %v776 = vadd.f32 0.0, %v775
        %v777 = vpop.f32.mrb[0].mxu0
        %778 = vdwg.mxu0
        %v779 = vld [vmem:[%s458] sm:$0xff]
        %v780 = vld [vmem:[%s458 + $0x8] sm:$0xff]
        %v781 = vld [vmem:[%s458 + $0x10] sm:$0xff]
        %v782 = vld [vmem:[%s458 + $0x18] sm:$0xff]
        %784 = vset.pattern.permute.xlu0 0
        %785 = vperm.xlu0 %784, %v779
        %v786 = vpop.permute.xlu0 %785
        %789 = vset.pattern.permute.xlu0 0
        %790 = vperm.xlu0 %789, %v780
        %v791 = vpop.permute.xlu0 %790
        %794 = vset.pattern.permute.xlu0 0
        %795 = vperm.xlu0 %794, %v781
        %v796 = vpop.permute.xlu0 %795
        %799 = vset.pattern.permute.xlu0 0
        %800 = vperm.xlu0 %799, %v782
        %v801 = vpop.permute.xlu0 %800
        %v803 = vmul.f32 %v765, %v786
        %v804 = vmul.f32 %v768, %v791
        %v805 = vmul.f32 %v773, %v796
        %v806 = vmul.f32 %v776, %v801
        %s807 = scalar_lea.vmem [#allocation4], %s471
        %v808 = vld [vmem:[%s807] sm:$0xff]
        %v809 = vld [vmem:[%s807 + $0x8] sm:$0xff]
        %v810 = vld [vmem:[%s807 + $0x10] sm:$0xff]
        %v811 = vld [vmem:[%s807 + $0x18] sm:$0xff]
        %v812 = vadd.f32 %v803, %v808
        %v813 = vadd.f32 %v804, %v809
        %v814 = vadd.f32 %v805, %v810
        %v815 = vadd.f32 %v806, %v811
        %v816 = vld [vmem:[%s462] sm:$0x1]
        %v818 = vlaneseq
        %v819 = vshrl.u32 %v818, 7
        %v820 = vsub.s32 0, %v819
        %v821 = vrot.slane %v816, %v820
        %v823 = vadd.f32 %v812, %v821
        %v824 = vadd.f32 %v813, %v821
        %v825 = vadd.f32 %v814, %v821
        %v826 = vadd.f32 %v815, %v821
        %v827 = vtanh.pop %v823
        %v828 = vtanh.pop %v824
        %v829 = vtanh.pop %v825
        %v830 = vtanh.pop %v826
        %v831 = vld [vmem:[%s402] sm:$0xf]
        %v832 = vld [vmem:[%s402 + $0x4] sm:$0xf]
        %v833 = vld [vmem:[%s402 + $0x8] sm:$0xf]
        %v834 = vld [vmem:[%s402 + $0xc] sm:$0xf]
        %v835 = vunpack.c.l.bf16 %v831
        %v836 = vunpack.c.l.bf16 %v832
        %v837 = vunpack.c.l.bf16 %v833
        %v838 = vunpack.c.l.bf16 %v834
        %v839 = vmul.f32 %v827, %v835
        %v840 = vmul.f32 %v828, %v836
        %v841 = vmul.f32 %v829, %v837
        %v842 = vmul.f32 %v830, %v838
        %v843 = vpack.c.bf16 %v840, %v839
        %v844 = vpack.c.bf16 %v842, %v841
        %s845 = sshra.s32 %s471, 4
        %s846 = sand.u32 %s471, 15
        %s847 = smul.addr %s845, 8
        %s848 = scalar_lea.vmem [#allocation2], %s847
        %849 = vst [vmem:[%s848] sm:$0xff] %v843
        %850 = vst [vmem:[%s848 + $0x8] sm:$0xff] %v844
        %p851 = scmp.eq.s32.totalorder %s27, 2
        // Predicated region
        $region77: #{graphsage_forward.1} parent=51 // pred_check
          %p852 = pneg %p851
        $region78: #{graphsage_forward.1} parent=51 // pred_check_branch
          %854 = sbr.rel (%p852) target = $region80
        $region79: #{graphsage_forward.1} parent=51 // pred_region
          %v855 = vld [vmem:[%s6] sm:$0xf]
          %v856 = vld [vmem:[%s6 + $0x4] sm:$0xf]
          %v857 = vld [vmem:[%s6 + $0x8] sm:$0xf]
          %v858 = vld [vmem:[%s6 + $0xc] sm:$0xf]
          %v859 = vld [vmem:[%s6 + $0x10] sm:$0xf]
          %v860 = vld [vmem:[%s6 + $0x14] sm:$0xf]
          %v861 = vld [vmem:[%s6 + $0x18] sm:$0xf]
          %v862 = vld [vmem:[%s6 + $0x1c] sm:$0xf]
          %v863 = vld [vmem:[%s6 + $0x20] sm:$0xf]
          %v864 = vld [vmem:[%s6 + $0x24] sm:$0xf]
          %v865 = vld [vmem:[%s6 + $0x28] sm:$0xf]
          %v866 = vld [vmem:[%s6 + $0x2c] sm:$0xf]
          %v867 = vld [vmem:[%s6 + $0x30] sm:$0xf]
          %v868 = vld [vmem:[%s6 + $0x34] sm:$0xf]
          %v869 = vld [vmem:[%s6 + $0x38] sm:$0xf]
          %v870 = vld [vmem:[%s6 + $0x3c] sm:$0xf]
          %v871 = vld [vmem:[%s7] sm:$0x1]
          %v873 = vlaneseq
          %v874 = vshrl.u32 %v873, 7
          %v875 = vsub.s32 0, %v874
          %v876 = vrot.slane %v871, %v875
          %v894 = vunpack.c.l.b16 %v855
          %v895 = vunpack.c.l.b16 %v856
          %v896 = vunpack.c.l.b16 %v857
          %v897 = vunpack.c.l.b16 %v858
          %v898 = vunpack.c.l.b16 %v859
          %v899 = vunpack.c.l.b16 %v860
          %v900 = vunpack.c.l.b16 %v861
          %v901 = vunpack.c.l.b16 %v862
          %v902 = vunpack.c.l.b16 %v863
          %v903 = vunpack.c.l.b16 %v864
          %v904 = vunpack.c.l.b16 %v865
          %v905 = vunpack.c.l.b16 %v866
          %v906 = vunpack.c.l.b16 %v867
          %v907 = vunpack.c.l.b16 %v868
          %v908 = vunpack.c.l.b16 %v869
          %v909 = vunpack.c.l.b16 %v870
          %v910 = vpack.c.b16 %v895, %v894
          %v911 = vpack.c.b16 %v897, %v896
          %v912 = vpack.c.b16 %v899, %v898
          %v913 = vpack.c.b16 %v901, %v900
          %v914 = vpack.c.b16 %v903, %v902
          %v915 = vpack.c.b16 %v905, %v904
          %v916 = vpack.c.b16 %v907, %v906
          %v917 = vpack.c.b16 %v909, %v908
          %926 = vmatprep.subr.bf16.mxu0 0
          %927 = vmatpush1.bf16.msra.mxu0 %v910
          %928 = vmatprep.subr.bf16.mxu0 0
          %929 = vmatpush1.bf16.msra.mxu0 %v911
          %930 = vmatprep.subr.bf16.mxu0 0
          %931 = vmatpush1.bf16.msra.mxu0 %v912
          %932 = vmatprep.subr.bf16.mxu0 0
          %933 = vmatpush1.bf16.msra.mxu0 %v913
          %934 = vmatprep.subr.bf16.mxu0 0
          %935 = vmatpush1.bf16.msra.mxu0 %v914
          %936 = vmatprep.subr.bf16.mxu0 0
          %937 = vmatpush1.bf16.msra.mxu0 %v915
          %938 = vmatprep.subr.bf16.mxu0 0
          %939 = vmatpush1.bf16.msra.mxu0 %v916
          %940 = vmatprep.subr.bf16.mxu0 0
          %941 = vmatpush1.bf16.msra.mxu0 %v917
          %942 = vmatprep.subr.bf16.mxu0 0
          %943 = vmatpush1.bf16.msra.mxu0 0
          %944 = vmatprep.subr.bf16.mxu0 0
          %945 = vmatpush1.bf16.msra.mxu0 0
          %946 = vmatprep.subr.bf16.mxu0 0
          %947 = vmatpush1.bf16.msra.mxu0 0
          %948 = vmatprep.subr.bf16.mxu0 0
          %949 = vmatpush1.bf16.msra.mxu0 0
          %950 = vmatprep.subr.bf16.mxu0 0
          %951 = vmatpush1.bf16.msra.mxu0 0
          %952 = vmatprep.subr.bf16.mxu0 0
          %953 = vmatpush1.bf16.msra.mxu0 0
          %954 = vmatprep.subr.bf16.mxu0 0
          %955 = vmatpush1.bf16.msra.mxu0 0
          %956 = vmatprep.subr.bf16.mxu0 0
          %957 = vmatpush1.bf16.msra.mxu0 0
          %958 = vmatprep.mubr.bf16.mxu0 0
          %959 = vmatmul.mubr.bf16.gmra.mrb[0].mxu0 %v843
          %v960 = vpop.f32.mrb[0].mxu0
          %v961 = vadd.f32 %v876, %v960
          %v962 = vpop.f32.mrb[0].mxu0
          %v963 = vpop.f32.mrb[0].mxu0
          %v964 = vadd.f32 %v876, %v963
          %v965 = vpop.f32.mrb[0].mxu0
          %966 = vmatprep.mubr.bf16.mxu0 0
          %967 = vmatmul.mubr.bf16.gmra.mrb[0].mxu0 %v844
          %v968 = vpop.f32.mrb[0].mxu0
          %v969 = vadd.f32 %v876, %v968
          %v970 = vpop.f32.mrb[0].mxu0
          %v971 = vpop.f32.mrb[0].mxu0
          %v972 = vadd.f32 %v876, %v971
          %v973 = vpop.f32.mrb[0].mxu0
          %974 = vdwg.mxu0
          %975 = vst [vmem:[%s468] sm:$0xff] %v961
          %976 = vst [vmem:[%s468 + $0x8] sm:$0xff] %v964
          %977 = vst [vmem:[%s468 + $0x10] sm:$0xff] %v969
          %978 = vst [vmem:[%s468 + $0x18] sm:$0xff] %v972
        $region80: #{graphsage_forward.1} parent=51 // pred_fallthru
          _
        %s979 = smul.u32 4, %s28
        %p980 = scmp.lt.s32.totalorder %s979, 7
        %s981 = scalar_select %p980, %s979, 7
        %s982 = smul.addr %s981, 8
        %s983 = scalar_lea.vmem %s8, %s982
        // Predicated region
        $region81: #{graphsage_forward.1} parent=51 // pred_check
          %p984 = pneg %p248
        $region82: #{graphsage_forward.1} parent=51 // pred_check_branch
          %986 = sbr.rel (%p984) target = $region84
        $region83: #{graphsage_forward.1} parent=51 // pred_region
          %s987 = smul.u32 4, %s28
        $region84: #{graphsage_forward.1} parent=51 // pred_fallthru
          _
      $region52: #{graphsage_forward.1} parent=5 // pred_fallthru
        _
      %p988 = scmp.le.s32.totalorder 2, %s18
      // Predicated region
      $region85: #{graphsage_forward.1} parent=5 // pred_check
        %p989 = pneg %p988
      $region86: #{graphsage_forward.1} parent=5 // pred_check_branch
        %991 = sbr.rel (%p989) target = $region88
      $region87: #{graphsage_forward.1} parent=5 // pred_region
        %s992 = ssub.s32 %s18, 2
        // Predicated region
        $region89: #{graphsage_forward.1} parent=87 // pred_check
          %p993 = pneg %p254
        $region90: #{graphsage_forward.1} parent=87 // pred_check_branch
          %995 = sbr.rel (%p993) target = $region92
        $region91: #{graphsage_forward.1} parent=87 // pred_region
          %s996 = smul.u32 4, %s30
          %p997 = scmp.lt.s32.totalorder %s996, 7
          %s998 = scalar_select %p997, %s996, 7
          %s999 = smul.addr %s998, 8
          %s1000 = scalar_lea.vmem %s8, %s999
        $region92: #{graphsage_forward.1} parent=87 // pred_fallthru
          _
      $region88: #{graphsage_forward.1} parent=5 // pred_fallthru
        _
    $region6: #{graphsage_forward.1} parent=1 // loop_footer
      %s22 = sadd.s32 1, %s18
    $region7: #{graphsage_forward.1} parent=1 // loop_footer_branch
      %17 = sbr.rel target = $region3
    $region8: #{graphsage_forward.1} parent=1 // loop_exit
      _
    %1001 = vsyncpa [#allocation6], 1
    %s1002 = scalar_lea.sflag [#allocation6], 1
    %1003 = vsyncpa %s1002, 1
    %1004 = vsyncpa [#allocation8], 1

</llo_original>
